<compile_context>
chip_gen: v7x
topology: tpu7x:2x2x1
jax: 0.10.0
libtpu: 0.0.40
codegen_flags: <defaults>
</compile_context>

<pallas_src>
import jax
import jax.numpy as jnp
from jax.experimental import pallas as pl
from jax.experimental.pallas import tpu as pltpu


def simple_nn_kernel(x_ref, w1_ref, b1_ref, w2_ref, b2_ref, out_ref):
    # fc1: (TB,784)bf16 @ (784,128)bf16 -> f32 accumulate on the MXU
    h = jnp.dot(x_ref[...], w1_ref[...], preferred_element_type=jnp.float32)
    # bias + relu in f32 (VPU/EUP ride free next to the MXU/DMA critical path)
    h = jnp.maximum(h + b1_ref[...], 0.0)
    # fc2: (TB,128)bf16 @ (128,10)bf16 -> f32 accumulate
    logits = jnp.dot(h.astype(jnp.bfloat16), w2_ref[...],
                     preferred_element_type=jnp.float32)
    logits = logits + b2_ref[...]
    # numerically stable softmax over dim=1, f32 throughout
    m = jnp.max(logits, axis=-1, keepdims=True)
    e = jnp.exp(logits - m)
    s = jnp.sum(e, axis=-1, keepdims=True)
    out_ref[...] = (e * pl.reciprocal(s, approx=True)).astype(out_ref.dtype)


def prepare_params(w1, b1, w2, b2):
    """One-time param prep (do NOT call per forward): PyTorch (out,in) weights
    are transposed to (in,out) and cast to bf16; biases become (1,N) f32."""
    return (
        jnp.asarray(w1).T.astype(jnp.bfloat16),          # (784, 128)
        jnp.asarray(b1).reshape(1, -1).astype(jnp.float32),  # (1, 128)
        jnp.asarray(w2).T.astype(jnp.bfloat16),          # (128, 10)
        jnp.asarray(b2).reshape(1, -1).astype(jnp.float32),  # (1, 10)
    )


def simple_nn_forward(x_nchw, params, *, tb=256):
    """x_nchw: (B, 1, 28, 28). Returns softmax probabilities (B, 10) f32."""
    w1_t, b1_2d, w2_t, b2_2d = params
    B = x_nchw.shape[0]
    D_in, H = w1_t.shape
    D_out = w2_t.shape[1]

    # Same element order as nn.Flatten; bf16 to halve x HBM/VMEM traffic.
    x_flat = x_nchw.reshape(B, -1).astype(jnp.bfloat16)

    # Batch tile: multiple of 8 (sublane), no larger than needed for this B.
    tb_eff = min(tb, ((B + 7) // 8) * 8)
    b_padded = pl.cdiv(B, tb_eff) * tb_eff
    if b_padded != B:
        x_flat = jnp.pad(x_flat, ((0, b_padded - B), (0, 0)))

    out = pl.pallas_call(
        simple_nn_kernel,
        out_shape=jax.ShapeDtypeStruct((b_padded, D_out), jnp.float32),
        grid_spec=pltpu.PrefetchScalarGridSpec(
            num_scalar_prefetch=0,
            grid=(b_padded // tb_eff,),
            in_specs=[
                pl.BlockSpec((tb_eff, D_in), lambda i: (i, 0)),  # x tile
                pl.BlockSpec((D_in, H), lambda i: (0, 0)),       # W1 resident
                pl.BlockSpec((1, H), lambda i: (0, 0)),          # b1 resident
                pl.BlockSpec((H, D_out), lambda i: (0, 0)),      # W2 resident
                pl.BlockSpec((1, D_out), lambda i: (0, 0)),      # b2 resident
            ],
            out_specs=pl.BlockSpec((tb_eff, D_out), lambda i: (i, 0)),
        ),
        compiler_params=pltpu.CompilerParams(
            dimension_semantics=("parallel",)),
    )(x_flat, w1_t, b1_2d, w2_t, b2_2d)

    return out[:B]


if __name__ == "__main__":
    key = jax.random.PRNGKey(0)
    k_x, k_w1, k_b1, k_w2, k_b2 = jax.random.split(key, 5)

    B = 8
    # MNIST-like NCHW batch
    x = jax.random.normal(k_x, (B, 1, 28, 28), dtype=jnp.float32)

    # PyTorch Linear weight shape convention: (out_features, in_features)
    w1 = jax.random.normal(k_w1, (128, 28 * 28), dtype=jnp.float32) * 0.02
    b1 = jax.random.normal(k_b1, (128,), dtype=jnp.float32) * 0.02
    w2 = jax.random.normal(k_w2, (10, 128), dtype=jnp.float32) * 0.02
    b2 = jax.random.normal(k_b2, (10,), dtype=jnp.float32) * 0.02

    params = prepare_params(w1, b1, w2, b2)   # one-time, outside forward path

    out = simple_nn_forward(x, params)
    out = jax.block_until_ready(out)
    assert out.shape == (B, 10)

    # Reference 1: full-f32 math (same as the PyTorch module). Loose tolerance
    # because the kernel uses bf16 MXU operands.
    x_flat = x.reshape(B, -1)
    ref_f32 = jax.nn.softmax(
        jnp.maximum(x_flat @ w1.T + b1, 0.0) @ w2.T + b2, axis=1)
    assert jnp.allclose(out, ref_f32, atol=1e-2), (
        float(jnp.max(jnp.abs(out - ref_f32))))

    # Reference 2: bf16-matched math (same quantization as the kernel).
    w1_t, b1_2d, w2_t, b2_2d = params
    h_ref = jnp.maximum(
        jnp.dot(x_flat.astype(jnp.bfloat16), w1_t,
                preferred_element_type=jnp.float32) + b1_2d, 0.0)
    logits_ref = jnp.dot(h_ref.astype(jnp.bfloat16), w2_t,
                         preferred_element_type=jnp.float32) + b2_2d
    ref_bf16 = jax.nn.softmax(logits_ref, axis=1)
    assert jnp.allclose(out, ref_bf16, atol=2e-3), (
        float(jnp.max(jnp.abs(out - ref_bf16))))

    # Rows sum to ~1 (approx reciprocal has ~1e-4 relative error).
    assert jnp.allclose(jnp.sum(out, axis=1), 1.0, atol=5e-3)

    # Exercise the batch-padding path (B not a multiple of 8).
    x_small = x[:5]
    out_small = jax.block_until_ready(simple_nn_forward(x_small, params))
    assert out_small.shape == (5, 10)
    assert jnp.allclose(out_small, ref_f32[:5], atol=1e-2)

    print("KERNEL_OK")
</pallas_src>

<mosaic_0001>
module attributes {stable_mosaic.version = 11 : i64} {
  func.func @simple_nn_kernel(%arg0: i32, %arg1: memref<8x784xbf16, #tpu.memory_space<vmem>>, %arg2: memref<784x128xbf16, #tpu.memory_space<vmem>>, %arg3: memref<1x128xf32, #tpu.memory_space<vmem>>, %arg4: memref<128x10xbf16, #tpu.memory_space<vmem>>, %arg5: memref<1x10xf32, #tpu.memory_space<vmem>>, %arg6: memref<8x10xf32, #tpu.memory_space<vmem>>) attributes {dimension_semantics = [#tpu.dimension_semantics<parallel>], iteration_bounds = array<i64: 1>, scalar_prefetch = 0 : i64, scratch_operands = 0 : i64, tpu.core_type = #tpu.core_type<tc>, window_params = [{transform_indices = @transform_0, window_bounds = array<i64: 8, 784>}, {pipeline_mode = #tpu.pipeline_mode<synchronous>, transform_indices = @transform_1, window_bounds = array<i64: 784, 128>}, {pipeline_mode = #tpu.pipeline_mode<synchronous>, transform_indices = @transform_2, window_bounds = array<i64: 1, 128>}, {pipeline_mode = #tpu.pipeline_mode<synchronous>, transform_indices = @transform_3, window_bounds = array<i64: 128, 10>}, {pipeline_mode = #tpu.pipeline_mode<synchronous>, transform_indices = @transform_4, window_bounds = array<i64: 1, 10>}, {transform_indices = @transform_5, window_bounds = array<i64: 8, 10>}]} {
    %c0 = arith.constant 0 : index
    %c0_0 = arith.constant 0 : index
    %0 = vector.load %arg1[%c0, %c0_0] : memref<8x784xbf16, #tpu.memory_space<vmem>>, vector<8x784xbf16>
    %c0_1 = arith.constant 0 : index
    %c0_2 = arith.constant 0 : index
    %1 = vector.load %arg2[%c0_1, %c0_2] : memref<784x128xbf16, #tpu.memory_space<vmem>>, vector<784x128xbf16>
    %cst = arith.constant dense<0.000000e+00> : vector<8x128xf32>
    %2 = tpu.matmul %0, %1, %cst {dimension_numbers = #tpu.dot_dimension_numbers<[1], [0], [0], [1], [0, 0, 1, 1], [], []>} : vector<8x784xbf16>, vector<784x128xbf16>, vector<8x128xf32> -> vector<8x128xf32>
    %c0_3 = arith.constant 0 : index
    %c0_4 = arith.constant 0 : index
    %3 = vector.load %arg3[%c0_3, %c0_4] : memref<1x128xf32, #tpu.memory_space<vmem>>, vector<1x128xf32>
    %4 = vector.broadcast %3 : vector<1x128xf32> to vector<8x128xf32>
    %5 = arith.addf %2, %4 : vector<8x128xf32>
    %cst_5 = arith.constant 0.000000e+00 : f32
    %6 = vector.broadcast %cst_5 : f32 to vector<8x128xf32>
    %7 = arith.maximumf %5, %6 : vector<8x128xf32>
    %8 = arith.truncf %7 : vector<8x128xf32> to vector<8x128xbf16>
    %c0_6 = arith.constant 0 : index
    %c0_7 = arith.constant 0 : index
    %9 = vector.load %arg4[%c0_6, %c0_7] : memref<128x10xbf16, #tpu.memory_space<vmem>>, vector<128x10xbf16>
    %cst_8 = arith.constant dense<0.000000e+00> : vector<8x10xf32>
    %10 = tpu.matmul %8, %9, %cst_8 {dimension_numbers = #tpu.dot_dimension_numbers<[1], [0], [0], [1], [0, 0, 1, 1], [], []>} : vector<8x128xbf16>, vector<128x10xbf16>, vector<8x10xf32> -> vector<8x10xf32>
    %c0_9 = arith.constant 0 : index
    %c0_10 = arith.constant 0 : index
    %11 = vector.load %arg5[%c0_9, %c0_10] : memref<1x10xf32, #tpu.memory_space<vmem>>, vector<1x10xf32>
    %12 = vector.broadcast %11 : vector<1x10xf32> to vector<8x10xf32>
    %13 = arith.addf %10, %12 : vector<8x10xf32>
    %cst_11 = arith.constant dense<0xFF800000> : vector<8xf32>
    %14 = vector.multi_reduction <maximumf>, %13, %cst_11 [1] : vector<8x10xf32> to vector<8xf32>
    %15 = vector.shape_cast %14 : vector<8xf32> to vector<8x1xf32>
    %16 = vector.broadcast %15 : vector<8x1xf32> to vector<8x10xf32>
    %17 = arith.subf %13, %16 : vector<8x10xf32>
    %18 = math.exp %17 : vector<8x10xf32>
    %cst_12 = arith.constant dense<0.000000e+00> : vector<8xf32>
    %19 = vector.multi_reduction <add>, %18, %cst_12 [1] : vector<8x10xf32> to vector<8xf32>
    %20 = vector.shape_cast %19 : vector<8xf32> to vector<8x1xf32>
    %21 = tpu.reciprocal %20 {approx = true} : vector<8x1xf32> -> vector<8x1xf32>
    %22 = vector.broadcast %21 : vector<8x1xf32> to vector<8x10xf32>
    %23 = arith.mulf %18, %22 : vector<8x10xf32>
    %c0_13 = arith.constant 0 : index
    %c0_14 = arith.constant 0 : index
    %24 = vector.load %arg6[%c0_13, %c0_14] : memref<8x10xf32, #tpu.memory_space<vmem>>, vector<8x10xf32>
    tpu.vector_store %arg6[%c0_13, %c0_14], %23 {strides = array<i32>} : memref<8x10xf32, #tpu.memory_space<vmem>>, vector<8x10xf32>,
    return
  }
  func.func @transform_0(%arg0: i32) -> (i32, i32) {
    %c0_i32 = arith.constant 0 : i32
    %c0_i32_0 = arith.constant 0 : i32
    return %arg0, %c0_i32 : i32, i32
  }
  func.func @transform_1(%arg0: i32) -> (i32, i32) {
    %c0_i32 = arith.constant 0 : i32
    %c0_i32_0 = arith.constant 0 : i32
    %c0_i32_1 = arith.constant 0 : i32
    return %c0_i32, %c0_i32_0 : i32, i32
  }
  func.func @transform_2(%arg0: i32) -> (i32, i32) {
    %c0_i32 = arith.constant 0 : i32
    %c0_i32_0 = arith.constant 0 : i32
    %c0_i32_1 = arith.constant 0 : i32
    return %c0_i32, %c0_i32_0 : i32, i32
  }
  func.func @transform_3(%arg0: i32) -> (i32, i32) {
    %c0_i32 = arith.constant 0 : i32
    %c0_i32_0 = arith.constant 0 : i32
    %c0_i32_1 = arith.constant 0 : i32
    return %c0_i32, %c0_i32_0 : i32, i32
  }
  func.func @transform_4(%arg0: i32) -> (i32, i32) {
    %c0_i32 = arith.constant 0 : i32
    %c0_i32_0 = arith.constant 0 : i32
    %c0_i32_1 = arith.constant 0 : i32
    return %c0_i32, %c0_i32_0 : i32, i32
  }
  func.func @transform_5(%arg0: i32) -> (i32, i32) {
    %c0_i32 = arith.constant 0 : i32
    %c0_i32_0 = arith.constant 0 : i32
    return %arg0, %c0_i32 : i32, i32
  }
}

</mosaic_0001>

<llo_original>
// kernel: tpu_custom_call.1
$region0: #{tpu_custom_call.1}
  #allocation0 [shape = 'u32[]', space=smem, size = 0x4, offset = 0x4, fixed_abs, tag = 'smem constant byte address 0x4 - core index']
  #allocation1 [shape = 'u32[144,128]{1,0:T(1,128)}', space=vmem, size = 0x12000, scoped, tag = 'internal scratch']
  %s0 = inlined_call_operand.vmem [shape: bf16[8,784], index: 0, kind: input, shape index: {}]
  %s1 = inlined_call_operand.hbm [shape: bf16[784,128], index: 1, kind: input, shape index: {}]
  %s2 = inlined_call_operand.vmem [shape: f32[1,128], index: 2, kind: input, shape index: {}]
  %s3 = inlined_call_operand.vmem [shape: bf16[128,10], index: 3, kind: input, shape index: {}]
  %s4 = inlined_call_operand.vmem [shape: f32[1,10], index: 4, kind: input, shape index: {}]
  %s5 = inlined_call_operand.hbm [shape: f32[8,10], index: 5, kind: output, shape index: {}]
  %s6 = sld [smem:[#allocation0]]
  $region34: #{tpu_custom_call.1} parent=0
    _
  %s8 = ssub.s32 1, %s6
  %s9 = scalar_select 0, %s8, %s6
  $region1: #{tpu_custom_call.1} parent=0
    #allocation2 [shape = 'u8[200704]{0}', space=vmem, size = 0x31000, scoped, tag = 'input window, operand 1, single buffered']
    #allocation3 [shape = 's32[1]{0}', space=sflag, size = 0x4, scoped, tag = 'scoped memory for tpu_custom_call.1']
    #allocation4 [shape = 's32[1]{0}', space=sflag, size = 0x4, scoped, tag = 'scoped memory for tpu_custom_call.1']
    #allocation5 [shape = 'u8[4096]{0}', space=vmem, size = 0x1000, scoped, tag = 'output window, operand 0, single buffered']
    %10 = vsyncpa [#allocation3], 0
    %11 = vsyncpa [#allocation4], 0
    // Predicated region
    $region2: #{tpu_custom_call.1} parent=1 // pred_check
      _
    $region3: #{tpu_custom_call.1} parent=1 // pred_check_branch
      %13 = sbr.rel (0) target = $region5
    $region4: #{tpu_custom_call.1} parent=1 // pred_region
      _
    $region5: #{tpu_custom_call.1} parent=1 // pred_fallthru
      _
    // Predicated region
    $region6: #{tpu_custom_call.1} parent=1 // pred_check
      _
    $region7: #{tpu_custom_call.1} parent=1 // pred_check_branch
      %15 = sbr.rel (0) target = $region9
    $region8: #{tpu_custom_call.1} parent=1 // pred_region
      %s17 = ssub.s32 6272, 6272
      %18 = vsyncadd [#allocation3], %s17
      %s19 = sshll.u32 [#allocation2], 4
      %s20 = int_to_ptr.vmem [resolvable:$true] %s19
      %25 = dma.hbm_to_vmem [thread:$0]  %s1, 6272, %s20, [#allocation3], 64, 64, 4
    $region9: #{tpu_custom_call.1} parent=1 // pred_fallthru
      _
    // Predicated region
    $region10: #{tpu_custom_call.1} parent=1 // pred_check
      _
    $region11: #{tpu_custom_call.1} parent=1 // pred_check_branch
      %27 = sbr.rel (0) target = $region13
    $region12: #{tpu_custom_call.1} parent=1 // pred_region
      _
    $region13: #{tpu_custom_call.1} parent=1 // pred_fallthru
      _
    // Predicated region
    $region14: #{tpu_custom_call.1} parent=1 // pred_check
      _
    $region15: #{tpu_custom_call.1} parent=1 // pred_check_branch
      %29 = sbr.rel (0) target = $region17
    $region16: #{tpu_custom_call.1} parent=1 // pred_region
      _
    $region17: #{tpu_custom_call.1} parent=1 // pred_fallthru
      _
    // Predicated region
    $region18: #{tpu_custom_call.1} parent=1 // pred_check
      _
    $region19: #{tpu_custom_call.1} parent=1 // pred_check_branch
      %31 = sbr.rel (0) target = $region21
    $region20: #{tpu_custom_call.1} parent=1 // pred_region
      _
    $region21: #{tpu_custom_call.1} parent=1 // pred_fallthru
      _
    // Predicated region
    $region22: #{tpu_custom_call.1} parent=1 // pred_check
      _
    $region23: #{tpu_custom_call.1} parent=1 // pred_check_branch
      %33 = sbr.rel (0) target = $region25
    $region24: #{tpu_custom_call.1} parent=1 // pred_region
      %34 = dma.done [#allocation3], 6272
    $region25: #{tpu_custom_call.1} parent=1 // pred_fallthru
      _
    %v36 = vld [vmem:[%s0] sm:$0xff]
    %v37 = vld [vmem:[%s0 + $0x8] sm:$0xff]
    %v38 = vld [vmem:[%s0 + $0x10] sm:$0xff]
    %v39 = vld [vmem:[%s0 + $0x18] sm:$0xf]
    %v40 = vld [vmem:[#allocation2] sm:$0xf]
    %v41 = vld [vmem:[#allocation2 + $0x4] sm:$0xf]
    %v42 = vld [vmem:[#allocation2 + $0x8] sm:$0xf]
    %v43 = vld [vmem:[#allocation2 + $0xc] sm:$0xf]
    %v44 = vld [vmem:[#allocation2 + $0x10] sm:$0xf]
    %v45 = vld [vmem:[#allocation2 + $0x14] sm:$0xf]
    %v46 = vld [vmem:[#allocation2 + $0x18] sm:$0xf]
    %v47 = vld [vmem:[#allocation2 + $0x1c] sm:$0xf]
    %v48 = vld [vmem:[#allocation2 + $0x20] sm:$0xf]
    %v49 = vld [vmem:[#allocation2 + $0x24] sm:$0xf]
    %v50 = vld [vmem:[#allocation2 + $0x28] sm:$0xf]
    %v51 = vld [vmem:[#allocation2 + $0x2c] sm:$0xf]
    %v52 = vld [vmem:[#allocation2 + $0x30] sm:$0xf]
    %v53 = vld [vmem:[#allocation2 + $0x34] sm:$0xf]
    %v54 = vld [vmem:[#allocation2 + $0x38] sm:$0xf]
    %v55 = vld [vmem:[#allocation2 + $0x3c] sm:$0xf]
    %v56 = vld [vmem:[#allocation2 + $0x40] sm:$0xf]
    %v57 = vld [vmem:[#allocation2 + $0x44] sm:$0xf]
    %v58 = vld [vmem:[#allocation2 + $0x48] sm:$0xf]
    %v59 = vld [vmem:[#allocation2 + $0x4c] sm:$0xf]
    %v60 = vld [vmem:[#allocation2 + $0x50] sm:$0xf]
    %v61 = vld [vmem:[#allocation2 + $0x54] sm:$0xf]
    %v62 = vld [vmem:[#allocation2 + $0x58] sm:$0xf]
    %v63 = vld [vmem:[#allocation2 + $0x5c] sm:$0xf]
    %v64 = vld [vmem:[#allocation2 + $0x60] sm:$0xf]
    %v65 = vld [vmem:[#allocation2 + $0x64] sm:$0xf]
    %v66 = vld [vmem:[#allocation2 + $0x68] sm:$0xf]
    %v67 = vld [vmem:[#allocation2 + $0x6c] sm:$0xf]
    %v68 = vld [vmem:[#allocation2 + $0x70] sm:$0xf]
    %v69 = vld [vmem:[#allocation2 + $0x74] sm:$0xf]
    %v70 = vld [vmem:[#allocation2 + $0x78] sm:$0xf]
    %v71 = vld [vmem:[#allocation2 + $0x7c] sm:$0xf]
    %v72 = vld [vmem:[#allocation2 + $0x80] sm:$0xf]
    %v73 = vld [vmem:[#allocation2 + $0x84] sm:$0xf]
    %v74 = vld [vmem:[#allocation2 + $0x88] sm:$0xf]
    %v75 = vld [vmem:[#allocation2 + $0x8c] sm:$0xf]
    %v76 = vld [vmem:[#allocation2 + $0x90] sm:$0xf]
    %v77 = vld [vmem:[#allocation2 + $0x94] sm:$0xf]
    %v78 = vld [vmem:[#allocation2 + $0x98] sm:$0xf]
    %v79 = vld [vmem:[#allocation2 + $0x9c] sm:$0xf]
    %v80 = vld [vmem:[#allocation2 + $0xa0] sm:$0xf]
    %v81 = vld [vmem:[#allocation2 + $0xa4] sm:$0xf]
    %v82 = vld [vmem:[#allocation2 + $0xa8] sm:$0xf]
    %v83 = vld [vmem:[#allocation2 + $0xac] sm:$0xf]
    %v84 = vld [vmem:[#allocation2 + $0xb0] sm:$0xf]
    %v85 = vld [vmem:[#allocation2 + $0xb4] sm:$0xf]
    %v86 = vld [vmem:[#allocation2 + $0xb8] sm:$0xf]
    %v87 = vld [vmem:[#allocation2 + $0xbc] sm:$0xf]
    %v88 = vld [vmem:[#allocation2 + $0xc0] sm:$0xf]
    %v89 = vld [vmem:[#allocation2 + $0xc4] sm:$0xf]
    %v90 = vld [vmem:[#allocation2 + $0xc8] sm:$0xf]
    %v91 = vld [vmem:[#allocation2 + $0xcc] sm:$0xf]
    %v92 = vld [vmem:[#allocation2 + $0xd0] sm:$0xf]
    %v93 = vld [vmem:[#allocation2 + $0xd4] sm:$0xf]
    %v94 = vld [vmem:[#allocation2 + $0xd8] sm:$0xf]
    %v95 = vld [vmem:[#allocation2 + $0xdc] sm:$0xf]
    %v96 = vld [vmem:[#allocation2 + $0xe0] sm:$0xf]
    %v97 = vld [vmem:[#allocation2 + $0xe4] sm:$0xf]
    %v98 = vld [vmem:[#allocation2 + $0xe8] sm:$0xf]
    %v99 = vld [vmem:[#allocation2 + $0xec] sm:$0xf]
    %v100 = vld [vmem:[#allocation2 + $0xf0] sm:$0xf]
    %v101 = vld [vmem:[#allocation2 + $0xf4] sm:$0xf]
    %v102 = vld [vmem:[#allocation2 + $0xf8] sm:$0xf]
    %v103 = vld [vmem:[#allocation2 + $0xfc] sm:$0xf]
    %v104 = vld [vmem:[#allocation2 + $0x100] sm:$0xf]
    %v105 = vld [vmem:[#allocation2 + $0x104] sm:$0xf]
    %v106 = vld [vmem:[#allocation2 + $0x108] sm:$0xf]
    %v107 = vld [vmem:[#allocation2 + $0x10c] sm:$0xf]
    %v108 = vld [vmem:[#allocation2 + $0x110] sm:$0xf]
    %v109 = vld [vmem:[#allocation2 + $0x114] sm:$0xf]
    %v110 = vld [vmem:[#allocation2 + $0x118] sm:$0xf]
    %v111 = vld [vmem:[#allocation2 + $0x11c] sm:$0xf]
    %v112 = vld [vmem:[#allocation2 + $0x120] sm:$0xf]
    %v113 = vld [vmem:[#allocation2 + $0x124] sm:$0xf]
    %v114 = vld [vmem:[#allocation2 + $0x128] sm:$0xf]
    %v115 = vld [vmem:[#allocation2 + $0x12c] sm:$0xf]
    %v116 = vld [vmem:[#allocation2 + $0x130] sm:$0xf]
    %v117 = vld [vmem:[#allocation2 + $0x134] sm:$0xf]
    %v118 = vld [vmem:[#allocation2 + $0x138] sm:$0xf]
    %v119 = vld [vmem:[#allocation2 + $0x13c] sm:$0xf]
    %v120 = vld [vmem:[#allocation2 + $0x140] sm:$0xf]
    %v121 = vld [vmem:[#allocation2 + $0x144] sm:$0xf]
    %v122 = vld [vmem:[#allocation2 + $0x148] sm:$0xf]
    %v123 = vld [vmem:[#allocation2 + $0x14c] sm:$0xf]
    %v124 = vld [vmem:[#allocation2 + $0x150] sm:$0xf]
    %v125 = vld [vmem:[#allocation2 + $0x154] sm:$0xf]
    %v126 = vld [vmem:[#allocation2 + $0x158] sm:$0xf]
    %v127 = vld [vmem:[#allocation2 + $0x15c] sm:$0xf]
    %v128 = vld [vmem:[#allocation2 + $0x160] sm:$0xf]
    %v129 = vld [vmem:[#allocation2 + $0x164] sm:$0xf]
    %v130 = vld [vmem:[#allocation2 + $0x168] sm:$0xf]
    %v131 = vld [vmem:[#allocation2 + $0x16c] sm:$0xf]
    %v132 = vld [vmem:[#allocation2 + $0x170] sm:$0xf]
    %v133 = vld [vmem:[#allocation2 + $0x174] sm:$0xf]
    %v134 = vld [vmem:[#allocation2 + $0x178] sm:$0xf]
    %v135 = vld [vmem:[#allocation2 + $0x17c] sm:$0xf]
    %v136 = vld [vmem:[#allocation2 + $0x180] sm:$0xf]
    %v137 = vld [vmem:[#allocation2 + $0x184] sm:$0xf]
    %v138 = vld [vmem:[%s2] sm:$0x1]
    %v140 = vlaneseq
    %v141 = vshrl.u32 %v140, 7
    %v142 = vsub.s32 0, %v141
    %v143 = vrot.slane %v138, %v142
    %v149 = vunpack.c.l.b16 %v36
    %v150 = vunpack.c.h.b16 %v36
    %v151 = vunpack.c.l.b16 %v37
    %v152 = vunpack.c.h.b16 %v37
    %v153 = vunpack.c.l.b16 %v38
    %v154 = vunpack.c.h.b16 %v38
    %v155 = vunpack.c.l.b16 %v39
    %v156 = vpack.c.b16 %v149, %v149
    %v157 = vpack.c.b16 %v150, %v150
    %v158 = vpack.c.b16 %v151, %v151
    %v159 = vpack.c.b16 %v152, %v152
    %v160 = vpack.c.b16 %v153, %v153
    %v161 = vpack.c.b16 %v154, %v154
    %v162 = vpack.c.b16 %v155, %v155
    %v267 = vunpack.c.l.b16 %v40
    %v268 = vunpack.c.l.b16 %v41
    %v269 = vunpack.c.l.b16 %v42
    %v270 = vunpack.c.l.b16 %v43
    %v271 = vunpack.c.l.b16 %v44
    %v272 = vunpack.c.l.b16 %v45
    %v273 = vunpack.c.l.b16 %v46
    %v274 = vunpack.c.l.b16 %v47
    %v275 = vunpack.c.l.b16 %v48
    %v276 = vunpack.c.l.b16 %v49
    %v277 = vunpack.c.l.b16 %v50
    %v278 = vunpack.c.l.b16 %v51
    %v279 = vunpack.c.l.b16 %v52
    %v280 = vunpack.c.l.b16 %v53
    %v281 = vunpack.c.l.b16 %v54
    %v282 = vunpack.c.l.b16 %v55
    %v283 = vunpack.c.l.b16 %v56
    %v284 = vunpack.c.l.b16 %v57
    %v285 = vunpack.c.l.b16 %v58
    %v286 = vunpack.c.l.b16 %v59
    %v287 = vunpack.c.l.b16 %v60
    %v288 = vunpack.c.l.b16 %v61
    %v289 = vunpack.c.l.b16 %v62
    %v290 = vunpack.c.l.b16 %v63
    %v291 = vunpack.c.l.b16 %v64
    %v292 = vunpack.c.l.b16 %v65
    %v293 = vunpack.c.l.b16 %v66
    %v294 = vunpack.c.l.b16 %v67
    %v295 = vunpack.c.l.b16 %v68
    %v296 = vunpack.c.l.b16 %v69
    %v297 = vunpack.c.l.b16 %v70
    %v298 = vunpack.c.l.b16 %v71
    %v299 = vunpack.c.l.b16 %v72
    %v300 = vunpack.c.l.b16 %v73
    %v301 = vunpack.c.l.b16 %v74
    %v302 = vunpack.c.l.b16 %v75
    %v303 = vunpack.c.l.b16 %v76
    %v304 = vunpack.c.l.b16 %v77
    %v305 = vunpack.c.l.b16 %v78
    %v306 = vunpack.c.l.b16 %v79
    %v307 = vunpack.c.l.b16 %v80
    %v308 = vunpack.c.l.b16 %v81
    %v309 = vunpack.c.l.b16 %v82
    %v310 = vunpack.c.l.b16 %v83
    %v311 = vunpack.c.l.b16 %v84
    %v312 = vunpack.c.l.b16 %v85
    %v313 = vunpack.c.l.b16 %v86
    %v314 = vunpack.c.l.b16 %v87
    %v315 = vunpack.c.l.b16 %v88
    %v316 = vunpack.c.l.b16 %v89
    %v317 = vunpack.c.l.b16 %v90
    %v318 = vunpack.c.l.b16 %v91
    %v319 = vunpack.c.l.b16 %v92
    %v320 = vunpack.c.l.b16 %v93
    %v321 = vunpack.c.l.b16 %v94
    %v322 = vunpack.c.l.b16 %v95
    %v323 = vunpack.c.l.b16 %v96
    %v324 = vunpack.c.l.b16 %v97
    %v325 = vunpack.c.l.b16 %v98
    %v326 = vunpack.c.l.b16 %v99
    %v327 = vunpack.c.l.b16 %v100
    %v328 = vunpack.c.l.b16 %v101
    %v329 = vunpack.c.l.b16 %v102
    %v330 = vunpack.c.l.b16 %v103
    %v331 = vunpack.c.l.b16 %v104
    %v332 = vunpack.c.l.b16 %v105
    %v333 = vunpack.c.l.b16 %v106
    %v334 = vunpack.c.l.b16 %v107
    %v335 = vunpack.c.l.b16 %v108
    %v336 = vunpack.c.l.b16 %v109
    %v337 = vunpack.c.l.b16 %v110
    %v338 = vunpack.c.l.b16 %v111
    %v339 = vunpack.c.l.b16 %v112
    %v340 = vunpack.c.l.b16 %v113
    %v341 = vunpack.c.l.b16 %v114
    %v342 = vunpack.c.l.b16 %v115
    %v343 = vunpack.c.l.b16 %v116
    %v344 = vunpack.c.l.b16 %v117
    %v345 = vunpack.c.l.b16 %v118
    %v346 = vunpack.c.l.b16 %v119
    %v347 = vunpack.c.l.b16 %v120
    %v348 = vunpack.c.l.b16 %v121
    %v349 = vunpack.c.l.b16 %v122
    %v350 = vunpack.c.l.b16 %v123
    %v351 = vunpack.c.l.b16 %v124
    %v352 = vunpack.c.l.b16 %v125
    %v353 = vunpack.c.l.b16 %v126
    %v354 = vunpack.c.l.b16 %v127
    %v355 = vunpack.c.l.b16 %v128
    %v356 = vunpack.c.l.b16 %v129
    %v357 = vunpack.c.l.b16 %v130
    %v358 = vunpack.c.l.b16 %v131
    %v359 = vunpack.c.l.b16 %v132
    %v360 = vunpack.c.l.b16 %v133
    %v361 = vunpack.c.l.b16 %v134
    %v362 = vunpack.c.l.b16 %v135
    %v363 = vunpack.c.l.b16 %v136
    %v364 = vunpack.c.l.b16 %v137
    %v365 = vpack.c.b16 %v268, %v267
    %v366 = vpack.c.b16 %v270, %v269
    %v367 = vpack.c.b16 %v272, %v271
    %v368 = vpack.c.b16 %v274, %v273
    %v369 = vpack.c.b16 %v276, %v275
    %v370 = vpack.c.b16 %v278, %v277
    %v371 = vpack.c.b16 %v280, %v279
    %v372 = vpack.c.b16 %v282, %v281
    %v373 = vpack.c.b16 %v284, %v283
    %v374 = vpack.c.b16 %v286, %v285
    %v375 = vpack.c.b16 %v288, %v287
    %v376 = vpack.c.b16 %v290, %v289
    %v377 = vpack.c.b16 %v292, %v291
    %v378 = vpack.c.b16 %v294, %v293
    %v379 = vpack.c.b16 %v296, %v295
    %v380 = vpack.c.b16 %v298, %v297
    %v381 = vpack.c.b16 %v300, %v299
    %v382 = vpack.c.b16 %v302, %v301
    %v383 = vpack.c.b16 %v304, %v303
    %v384 = vpack.c.b16 %v306, %v305
    %v385 = vpack.c.b16 %v308, %v307
    %v386 = vpack.c.b16 %v310, %v309
    %v387 = vpack.c.b16 %v312, %v311
    %v388 = vpack.c.b16 %v314, %v313
    %v389 = vpack.c.b16 %v316, %v315
    %v390 = vpack.c.b16 %v318, %v317
    %v391 = vpack.c.b16 %v320, %v319
    %v392 = vpack.c.b16 %v322, %v321
    %v393 = vpack.c.b16 %v324, %v323
    %v394 = vpack.c.b16 %v326, %v325
    %v395 = vpack.c.b16 %v328, %v327
    %v396 = vpack.c.b16 %v330, %v329
    %v397 = vpack.c.b16 %v332, %v331
    %v398 = vpack.c.b16 %v334, %v333
    %v399 = vpack.c.b16 %v336, %v335
    %v400 = vpack.c.b16 %v338, %v337
    %v401 = vpack.c.b16 %v340, %v339
    %v402 = vpack.c.b16 %v342, %v341
    %v403 = vpack.c.b16 %v344, %v343
    %v404 = vpack.c.b16 %v346, %v345
    %v405 = vpack.c.b16 %v348, %v347
    %v406 = vpack.c.b16 %v350, %v349
    %v407 = vpack.c.b16 %v352, %v351
    %v408 = vpack.c.b16 %v354, %v353
    %v409 = vpack.c.b16 %v356, %v355
    %v410 = vpack.c.b16 %v358, %v357
    %v411 = vpack.c.b16 %v360, %v359
    %v412 = vpack.c.b16 %v362, %v361
    %v413 = vpack.c.b16 %v364, %v363
    %vm463 = vcmask 130048
    %v465 = vsel %vm463, %v162, 0
    %467 = vmatprep.subr.bf16.mxu0 0
    %468 = vmatpush1.bf16.msra.mxu0 %v365
    %469 = vmatprep.subr.bf16.mxu0 0
    %470 = vmatpush1.bf16.msra.mxu0 %v366
    %471 = vmatprep.subr.bf16.mxu0 0
    %472 = vmatpush1.bf16.msra.mxu0 %v367
    %473 = vmatprep.subr.bf16.mxu0 0
    %474 = vmatpush1.bf16.msra.mxu0 %v368
    %475 = vmatprep.subr.bf16.mxu0 0
    %476 = vmatpush1.bf16.msra.mxu0 %v369
    %477 = vmatprep.subr.bf16.mxu0 0
    %478 = vmatpush1.bf16.msra.mxu0 %v370
    %479 = vmatprep.subr.bf16.mxu0 0
    %480 = vmatpush1.bf16.msra.mxu0 %v371
    %481 = vmatprep.subr.bf16.mxu0 0
    %482 = vmatpush1.bf16.msra.mxu0 %v372
    %483 = vmatprep.subr.bf16.mxu0 0
    %484 = vmatpush1.bf16.msra.mxu0 %v373
    %485 = vmatprep.subr.bf16.mxu0 0
    %486 = vmatpush1.bf16.msra.mxu0 %v374
    %487 = vmatprep.subr.bf16.mxu0 0
    %488 = vmatpush1.bf16.msra.mxu0 %v375
    %489 = vmatprep.subr.bf16.mxu0 0
    %490 = vmatpush1.bf16.msra.mxu0 %v376
    %491 = vmatprep.subr.bf16.mxu0 0
    %492 = vmatpush1.bf16.msra.mxu0 %v377
    %493 = vmatprep.subr.bf16.mxu0 0
    %494 = vmatpush1.bf16.msra.mxu0 %v378
    %495 = vmatprep.subr.bf16.mxu0 0
    %496 = vmatpush1.bf16.msra.mxu0 %v379
    %497 = vmatprep.subr.bf16.mxu0 0
    %498 = vmatpush1.bf16.msra.mxu0 %v380
    %499 = vmatprep.mubr.bf16.mxu0 %v157
    %500 = vmatmul.mubr.bf16.gmra.mrb[0].mxu0 %v156
    %v501 = vpop.f32.mrb[0].mxu0
    %v502 = vadd.f32 %v143, %v501
    %v503 = vpop.f32.mrb[0].mxu0
    %v504 = vpop.f32.mrb[0].mxu0
    %v505 = vpop.f32.mrb[0].mxu0
    %506 = vdwg.mxu0
    %507 = vmatprep.subr.bf16.mxu0 0
    %508 = vmatpush1.bf16.msra.mxu0 %v381
    %509 = vmatprep.subr.bf16.mxu0 0
    %510 = vmatpush1.bf16.msra.mxu0 %v382
    %511 = vmatprep.subr.bf16.mxu0 0
    %512 = vmatpush1.bf16.msra.mxu0 %v383
    %513 = vmatprep.subr.bf16.mxu0 0
    %514 = vmatpush1.bf16.msra.mxu0 %v384
    %515 = vmatprep.subr.bf16.mxu0 0
    %516 = vmatpush1.bf16.msra.mxu0 %v385
    %517 = vmatprep.subr.bf16.mxu0 0
    %518 = vmatpush1.bf16.msra.mxu0 %v386
    %519 = vmatprep.subr.bf16.mxu0 0
    %520 = vmatpush1.bf16.msra.mxu0 %v387
    %521 = vmatprep.subr.bf16.mxu0 0
    %522 = vmatpush1.bf16.msra.mxu0 %v388
    %523 = vmatprep.subr.bf16.mxu0 0
    %524 = vmatpush1.bf16.msra.mxu0 %v389
    %525 = vmatprep.subr.bf16.mxu0 0
    %526 = vmatpush1.bf16.msra.mxu0 %v390
    %527 = vmatprep.subr.bf16.mxu0 0
    %528 = vmatpush1.bf16.msra.mxu0 %v391
    %529 = vmatprep.subr.bf16.mxu0 0
    %530 = vmatpush1.bf16.msra.mxu0 %v392
    %531 = vmatprep.subr.bf16.mxu0 0
    %532 = vmatpush1.bf16.msra.mxu0 %v393
    %533 = vmatprep.subr.bf16.mxu0 0
    %534 = vmatpush1.bf16.msra.mxu0 %v394
    %535 = vmatprep.subr.bf16.mxu0 0
    %536 = vmatpush1.bf16.msra.mxu0 %v395
    %537 = vmatprep.subr.bf16.mxu0 0
    %538 = vmatpush1.bf16.msra.mxu0 %v396
    %539 = vmatprep.mubr.bf16.mxu0 %v159
    %540 = vmatmul.mubr.bf16.gmra.mrb[0].mxu0 %v158
    %v541 = vpop.f32.mrb[0].mxu0
    %v542 = vadd.f32 %v502, %v541
    %v543 = vpop.f32.mrb[0].mxu0
    %v544 = vpop.f32.mrb[0].mxu0
    %v545 = vpop.f32.mrb[0].mxu0
    %546 = vdwg.mxu0
    %547 = vmatprep.subr.bf16.mxu0 0
    %548 = vmatpush1.bf16.msra.mxu0 %v397
    %549 = vmatprep.subr.bf16.mxu0 0
    %550 = vmatpush1.bf16.msra.mxu0 %v398
    %551 = vmatprep.subr.bf16.mxu0 0
    %552 = vmatpush1.bf16.msra.mxu0 %v399
    %553 = vmatprep.subr.bf16.mxu0 0
    %554 = vmatpush1.bf16.msra.mxu0 %v400
    %555 = vmatprep.subr.bf16.mxu0 0
    %556 = vmatpush1.bf16.msra.mxu0 %v401
    %557 = vmatprep.subr.bf16.mxu0 0
    %558 = vmatpush1.bf16.msra.mxu0 %v402
    %559 = vmatprep.subr.bf16.mxu0 0
    %560 = vmatpush1.bf16.msra.mxu0 %v403
    %561 = vmatprep.subr.bf16.mxu0 0
    %562 = vmatpush1.bf16.msra.mxu0 %v404
    %563 = vmatprep.subr.bf16.mxu0 0
    %564 = vmatpush1.bf16.msra.mxu0 %v405
    %565 = vmatprep.subr.bf16.mxu0 0
    %566 = vmatpush1.bf16.msra.mxu0 %v406
    %567 = vmatprep.subr.bf16.mxu0 0
    %568 = vmatpush1.bf16.msra.mxu0 %v407
    %569 = vmatprep.subr.bf16.mxu0 0
    %570 = vmatpush1.bf16.msra.mxu0 %v408
    %571 = vmatprep.subr.bf16.mxu0 0
    %572 = vmatpush1.bf16.msra.mxu0 %v409
    %573 = vmatprep.subr.bf16.mxu0 0
    %574 = vmatpush1.bf16.msra.mxu0 %v410
    %575 = vmatprep.subr.bf16.mxu0 0
    %576 = vmatpush1.bf16.msra.mxu0 %v411
    %577 = vmatprep.subr.bf16.mxu0 0
    %578 = vmatpush1.bf16.msra.mxu0 %v412
    %579 = vmatprep.mubr.bf16.mxu0 %v161
    %580 = vmatmul.mubr.bf16.gmra.mrb[0].mxu0 %v160
    %v581 = vpop.f32.mrb[0].mxu0
    %v582 = vadd.f32 %v542, %v581
    %v583 = vpop.f32.mrb[0].mxu0
    %v584 = vpop.f32.mrb[0].mxu0
    %v585 = vpop.f32.mrb[0].mxu0
    %586 = vdwg.mxu0
    %587 = vmatprep.subr.bf16.mxu0 0
    %588 = vmatpush1.bf16.msra.mxu0 %v413
    %589 = vmatprep.subr.bf16.mxu0 0
    %590 = vmatpush1.bf16.msra.mxu0 0
    %591 = vmatprep.subr.bf16.mxu0 0
    %592 = vmatpush1.bf16.msra.mxu0 0
    %593 = vmatprep.subr.bf16.mxu0 0
    %594 = vmatpush1.bf16.msra.mxu0 0
    %595 = vmatprep.subr.bf16.mxu0 0
    %596 = vmatpush1.bf16.msra.mxu0 0
    %597 = vmatprep.subr.bf16.mxu0 0
    %598 = vmatpush1.bf16.msra.mxu0 0
    %599 = vmatprep.subr.bf16.mxu0 0
    %600 = vmatpush1.bf16.msra.mxu0 0
    %601 = vmatprep.subr.bf16.mxu0 0
    %602 = vmatpush1.bf16.msra.mxu0 0
    %603 = vmatprep.subr.bf16.mxu0 0
    %604 = vmatpush1.bf16.msra.mxu0 0
    %605 = vmatprep.subr.bf16.mxu0 0
    %606 = vmatpush1.bf16.msra.mxu0 0
    %607 = vmatprep.subr.bf16.mxu0 0
    %608 = vmatpush1.bf16.msra.mxu0 0
    %609 = vmatprep.subr.bf16.mxu0 0
    %610 = vmatpush1.bf16.msra.mxu0 0
    %611 = vmatprep.subr.bf16.mxu0 0
    %612 = vmatpush1.bf16.msra.mxu0 0
    %613 = vmatprep.subr.bf16.mxu0 0
    %614 = vmatpush1.bf16.msra.mxu0 0
    %615 = vmatprep.subr.bf16.mxu0 0
    %616 = vmatpush1.bf16.msra.mxu0 0
    %617 = vmatprep.subr.bf16.mxu0 0
    %618 = vmatpush1.bf16.msra.mxu0 0
    %619 = vmatprep.mubr.bf16.mxu0 0
    %620 = vmatmul.mubr.bf16.gmra.mrb[0].mxu0 %v465
    %v621 = vpop.f32.mrb[0].mxu0
    %v622 = vadd.f32 %v582, %v621
    %v623 = vpop.f32.mrb[0].mxu0
    %v624 = vpop.f32.mrb[0].mxu0
    %v625 = vpop.f32.mrb[0].mxu0
    %626 = vdwg.mxu0
    %v627 = vmax.f32 %v622, 0.0
    %v628 = vpack.c.bf16 %v627, %v627
    %v629 = vld [vmem:[%s3] sm:$0xf]
    %v630 = vld [vmem:[%s3 + $0x4] sm:$0xf]
    %v631 = vld [vmem:[%s3 + $0x8] sm:$0xf]
    %v632 = vld [vmem:[%s3 + $0xc] sm:$0xf]
    %v633 = vld [vmem:[%s3 + $0x10] sm:$0xf]
    %v634 = vld [vmem:[%s3 + $0x14] sm:$0xf]
    %v635 = vld [vmem:[%s3 + $0x18] sm:$0xf]
    %v636 = vld [vmem:[%s3 + $0x1c] sm:$0xf]
    %v637 = vld [vmem:[%s3 + $0x20] sm:$0xf]
    %v638 = vld [vmem:[%s3 + $0x24] sm:$0xf]
    %v639 = vld [vmem:[%s3 + $0x28] sm:$0xf]
    %v640 = vld [vmem:[%s3 + $0x2c] sm:$0xf]
    %v641 = vld [vmem:[%s3 + $0x30] sm:$0xf]
    %v642 = vld [vmem:[%s3 + $0x34] sm:$0xf]
    %v643 = vld [vmem:[%s3 + $0x38] sm:$0xf]
    %v644 = vld [vmem:[%s3 + $0x3c] sm:$0xf]
    %v645 = vld [vmem:[%s4] sm:$0x1]
    %v647 = vlaneseq
    %v648 = vshrl.u32 %v647, 7
    %v649 = vsub.s32 0, %v648
    %v650 = vrot.slane %v645, %v649
    %v668 = vunpack.c.l.b16 %v629
    %v669 = vunpack.c.l.b16 %v630
    %v670 = vunpack.c.l.b16 %v631
    %v671 = vunpack.c.l.b16 %v632
    %v672 = vunpack.c.l.b16 %v633
    %v673 = vunpack.c.l.b16 %v634
    %v674 = vunpack.c.l.b16 %v635
    %v675 = vunpack.c.l.b16 %v636
    %v676 = vunpack.c.l.b16 %v637
    %v677 = vunpack.c.l.b16 %v638
    %v678 = vunpack.c.l.b16 %v639
    %v679 = vunpack.c.l.b16 %v640
    %v680 = vunpack.c.l.b16 %v641
    %v681 = vunpack.c.l.b16 %v642
    %v682 = vunpack.c.l.b16 %v643
    %v683 = vunpack.c.l.b16 %v644
    %v684 = vpack.c.b16 %v669, %v668
    %v685 = vpack.c.b16 %v671, %v670
    %v686 = vpack.c.b16 %v673, %v672
    %v687 = vpack.c.b16 %v675, %v674
    %v688 = vpack.c.b16 %v677, %v676
    %v689 = vpack.c.b16 %v679, %v678
    %v690 = vpack.c.b16 %v681, %v680
    %v691 = vpack.c.b16 %v683, %v682
    %700 = vmatprep.subr.bf16.mxu0 0
    %701 = vmatpush1.bf16.msra.mxu0 %v684
    %702 = vmatprep.subr.bf16.mxu0 0
    %703 = vmatpush1.bf16.msra.mxu0 %v685
    %704 = vmatprep.subr.bf16.mxu0 0
    %705 = vmatpush1.bf16.msra.mxu0 %v686
    %706 = vmatprep.subr.bf16.mxu0 0
    %707 = vmatpush1.bf16.msra.mxu0 %v687
    %708 = vmatprep.subr.bf16.mxu0 0
    %709 = vmatpush1.bf16.msra.mxu0 %v688
    %710 = vmatprep.subr.bf16.mxu0 0
    %711 = vmatpush1.bf16.msra.mxu0 %v689
    %712 = vmatprep.subr.bf16.mxu0 0
    %713 = vmatpush1.bf16.msra.mxu0 %v690
    %714 = vmatprep.subr.bf16.mxu0 0
    %715 = vmatpush1.bf16.msra.mxu0 %v691
    %716 = vmatprep.subr.bf16.mxu0 0
    %717 = vmatpush1.bf16.msra.mxu0 0
    %718 = vmatprep.subr.bf16.mxu0 0
    %719 = vmatpush1.bf16.msra.mxu0 0
    %720 = vmatprep.subr.bf16.mxu0 0
    %721 = vmatpush1.bf16.msra.mxu0 0
    %722 = vmatprep.subr.bf16.mxu0 0
    %723 = vmatpush1.bf16.msra.mxu0 0
    %724 = vmatprep.subr.bf16.mxu0 0
    %725 = vmatpush1.bf16.msra.mxu0 0
    %726 = vmatprep.subr.bf16.mxu0 0
    %727 = vmatpush1.bf16.msra.mxu0 0
    %728 = vmatprep.subr.bf16.mxu0 0
    %729 = vmatpush1.bf16.msra.mxu0 0
    %730 = vmatprep.subr.bf16.mxu0 0
    %731 = vmatpush1.bf16.msra.mxu0 0
    %732 = vmatprep.mubr.bf16.mxu0 0
    %733 = vmatmul.mubr.bf16.gmra.mrb[0].mxu0 %v628
    %v734 = vpop.f32.mrb[0].mxu0
    %v735 = vadd.f32 %v650, %v734
    %v736 = vpop.f32.mrb[0].mxu0
    %v737 = vpop.f32.mrb[0].mxu0
    %v738 = vpop.f32.mrb[0].mxu0
    %739 = vdwg.mxu0
    %vm740 = vcmask 80896
    %v741 = vsel %vm740, %v735, -inf
    %742 = vmax.xlane.f32.xlu0 %v741
    %v743 = vpop.xlane.xlu0 %742
    %v744 = vsub.f32 %v735, %v743
    %v745 = vmul.f32 %v744, 1.442695
    %v746 = vpow.pop %v745
    %v747 = vsel %vm740, %v746, 0.0
    %748 = vadd.xlane.f32.xlu0 %v747
    %v749 = vpop.xlane.xlu0 %748
    %v750 = vrcp.pop %v749
    %v751 = vmul.f32 %v746, %v750
    %752 = vst.msk [vmem:[#allocation5] sm:$0xff] %vm740, %v751
    // Predicated region
    $region26: #{tpu_custom_call.1} parent=1 // pred_check
      _
    $region27: #{tpu_custom_call.1} parent=1 // pred_check_branch
      %754 = sbr.rel (0) target = $region29
    $region28: #{tpu_custom_call.1} parent=1 // pred_region
      %s756 = ssub.s32 128, 128
      %757 = vsyncadd [#allocation4], %s756
      %s759 = sshll.u32 [#allocation5], 4
      %s760 = int_to_ptr.vmem [resolvable:$true] %s759
      %762 = dma.vmem_to_hbm [thread:$0]  %s760, 128, %s5, [#allocation4]
    $region29: #{tpu_custom_call.1} parent=1 // pred_fallthru
      _
    // Predicated region
    $region30: #{tpu_custom_call.1} parent=1 // pred_check
      _
    $region31: #{tpu_custom_call.1} parent=1 // pred_check_branch
      %764 = sbr.rel (0) target = $region33
    $region32: #{tpu_custom_call.1} parent=1 // pred_region
      %765 = dma.done [#allocation4], 128
    $region33: #{tpu_custom_call.1} parent=1 // pred_fallthru
      _
    %766 = vsyncpa [#allocation3], 1
    %767 = vsyncpa [#allocation4], 1

</llo_original>
